<compile_context>
chip_gen: v7x
topology: tpu7x:2x2x1
jax: 0.10.0
libtpu: 0.0.40
codegen_flags: <defaults>
</compile_context>

<pallas_src>
import functools

import jax
import jax.numpy as jnp
from jax.experimental import pallas as pl
from jax.experimental.pallas import tpu as pltpu

M_FEAT = 16        # m
N_CLASSES = 20     # linear output
IN_FEAT = 3        # input point features (rgb)


def _round_up(a, b):
    return (a + b - 1) // b * b


def _fused_point_kernel(xt_ref, w1t_ref, shift_ref, w2t_ref, b2t_ref, o_ref):
    # xt_ref:    (3, TN)   f32 point features, points on the lane axis
    # w1t_ref:   (16, 3)   central conv tap, transposed, bn_scale pre-folded
    # shift_ref: (16, 1)   folded BN shift  = beta - mean * scale
    # w2t_ref:   (20, 16)  linear weight, transposed (out x in), bf16
    # b2t_ref:   (20, 1)   linear bias, f32
    # o_ref:     (20, TN)  lane-dense bf16 output tile
    xt = xt_ref[...]                                  # (3, TN) f32
    w1t = w1t_ref[...]                                # (16, 3) f32

    # SubmanifoldConvolution central tap (3 -> m), K=3 contraction done as
    # three VPU broadcast multiply-adds (avoids a tiny-K MXU push/pop).
    h = (w1t[:, 0:1] * xt[0:1, :]
         + w1t[:, 1:2] * xt[1:2, :]
         + w1t[:, 2:3] * xt[2:3, :])                  # (16, TN) f32

    # BatchNormReLU(m): scale already folded into w1, only shift + relu left.
    h = jnp.maximum(h + shift_ref[...], 0.0)

    # nn.Linear(m, 20): single bf16 MXU pass, f32 accumulation.
    y = jnp.dot(w2t_ref[...], h.astype(jnp.bfloat16),
                preferred_element_type=jnp.float32)   # (20, TN) f32
    y = y + b2t_ref[...]
    o_ref[...] = y.astype(o_ref.dtype)                # bf16 lane-dense store


@functools.partial(jax.jit, static_argnames=("tile_n", "module_layout"))
def point_pipeline(x, w1, bn_scale, bn_shift, w2, b2, *,
                   tile_n=32768, module_layout=False):
    """x: (N, 3) f32 point features.

    Returns:
      module_layout=False (default): (20, N) bf16 lane-dense logits
        (class-major; argmax over axis 0).  This avoids a full extra HBM
        read/write pass for a transpose.
      module_layout=True: (N, 20) f32 logits, matching the PyTorch module.
    """
    n = x.shape[0]

    # Tile selection: at least 2 grid steps (so v7x can shard across both
    # TensorCores), tiles as large as possible (<= tile_n) to amortize the
    # per-grid-step overhead, lane dim a multiple of 128.
    grid_steps = max(2, pl.cdiv(n, max(tile_n, 128)))
    tile = max(128, _round_up(pl.cdiv(n, grid_steps), 128))
    n_pad = _round_up(n, tile)
    grid = (n_pad // tile,)

    # Host-side parameter prep (tiny, outside the kernel).
    w1_folded = w1 * bn_scale.reshape(1, M_FEAT)          # fold BN scale (exact)
    w1t = w1_folded.T.astype(jnp.float32)                 # (16, 3)
    shift = bn_shift.reshape(M_FEAT, 1).astype(jnp.float32)
    w2t = w2.T.astype(jnp.bfloat16)                       # (20, 16) bf16 weight
    b2t = b2.reshape(N_CLASSES, 1).astype(jnp.float32)

    # f32 point features, padded + transposed to channels-on-sublanes /
    # points-on-lanes layout in a single fused pad pass.
    xt = jnp.pad(x.T.astype(jnp.float32), ((0, 0), (0, n_pad - n)))

    cost = pl.CostEstimate(
        flops=2 * n_pad * (IN_FEAT * M_FEAT + M_FEAT * N_CLASSES),
        transcendentals=0,
        bytes_accessed=n_pad * (IN_FEAT * 4 + N_CLASSES * 2),
    )

    out_t = pl.pallas_call(
        _fused_point_kernel,
        out_shape=jax.ShapeDtypeStruct((N_CLASSES, n_pad), jnp.bfloat16),
        grid_spec=pl.GridSpec(
            grid=grid,
            in_specs=[
                pl.BlockSpec((IN_FEAT, tile), lambda i: (0, i)),       # x^T tile
                pl.BlockSpec((M_FEAT, IN_FEAT), lambda i: (0, 0)),     # w1^T (folded)
                pl.BlockSpec((M_FEAT, 1), lambda i: (0, 0)),           # bn shift
                pl.BlockSpec((N_CLASSES, M_FEAT), lambda i: (0, 0)),   # w2^T (bf16)
                pl.BlockSpec((N_CLASSES, 1), lambda i: (0, 0)),        # b2
            ],
            out_specs=pl.BlockSpec((N_CLASSES, tile), lambda i: (0, i)),
        ),
        compiler_params=pltpu.CompilerParams(
            dimension_semantics=("parallel",)),   # shards N across TCs (v7x)
        cost_estimate=cost,
    )(xt, w1t, shift, w2t, b2t)

    # NOTE: padded tail columns contain relu(shift)@w2 + b2 garbage; the slice
    # below drops them — do not remove it.
    out_t = out_t[:, :n]                          # (20, N) bf16, lane-dense
    if module_layout:
        return out_t.T.astype(jnp.float32)        # (N, 20) f32, module parity
    return out_t


def _reference(x, w1, bn_scale, bn_shift, w2, b2):
    # Same math as the module (conv central tap -> BN affine -> relu -> linear),
    # in pure f32.
    h = x @ w1
    h = jnp.maximum(h * bn_scale + bn_shift, 0.0)
    return h @ w2 + b2


if __name__ == "__main__":
    key = jax.random.PRNGKey(0)
    k_x, k_w1, k_g, k_b, k_mu, k_var, k_w2, k_b2 = jax.random.split(key, 8)

    N = 2500   # number of active points (non-multiple of tile to test padding)

    # Input point features (rgb per active voxel) — what scn.InputLayer feeds
    # the submanifold conv.
    x = jax.random.normal(k_x, (N, IN_FEAT), dtype=jnp.float32)

    # Deterministic synthetic parameters (not a checkpoint).
    w1 = jax.random.normal(k_w1, (IN_FEAT, M_FEAT), dtype=jnp.float32) * 0.1

    gamma = 1.0 + 0.1 * jax.random.normal(k_g, (M_FEAT,), dtype=jnp.float32)
    beta = 0.1 * jax.random.normal(k_b, (M_FEAT,), dtype=jnp.float32)
    running_mean = 0.1 * jax.random.normal(k_mu, (M_FEAT,), dtype=jnp.float32)
    running_var = jnp.abs(1.0 + 0.1 * jax.random.normal(k_var, (M_FEAT,), dtype=jnp.float32))
    eps = 1e-5
    bn_scale = (gamma / jnp.sqrt(running_var + eps)).reshape(1, M_FEAT)
    bn_shift = (beta - running_mean * bn_scale[0]).reshape(1, M_FEAT)

    w2 = jax.random.normal(k_w2, (M_FEAT, N_CLASSES), dtype=jnp.float32) * 0.1
    b2 = (0.1 * jax.random.normal(k_b2, (N_CLASSES,), dtype=jnp.float32)).reshape(1, N_CLASSES)

    # Fast path: lane-dense (20, N) bf16 logits, no wrapper transpose.
    out_cn = point_pipeline(x, w1, bn_scale, bn_shift, w2, b2)
    out_cn = jax.block_until_ready(out_cn)

    # Module-parity path: (N, 20) f32, matches the PyTorch forward layout.
    out_nc = point_pipeline(x, w1, bn_scale, bn_shift, w2, b2, module_layout=True)
    out_nc = jax.block_until_ready(out_nc)

    ref = _reference(x, w1, bn_scale, bn_shift, w2, b2)     # (N, 20) f32

    assert out_cn.shape == (N_CLASSES, N) and out_cn.dtype == jnp.bfloat16
    assert out_nc.shape == (N, N_CLASSES)
    # bf16 output + bf16 MXU pass -> ~0.4-1% relative error vs pure f32 ref.
    assert jnp.allclose(out_cn.astype(jnp.float32).T, ref, atol=1e-2, rtol=1e-2), \
        "lane-dense output mismatch vs reference"
    assert jnp.allclose(out_nc, ref, atol=1e-2, rtol=1e-2), \
        "module-layout output mismatch vs reference"

    print("KERNEL_OK")
</pallas_src>

<mosaic_0001>
module attributes {stable_mosaic.version = 11 : i64} {
  func.func @_fused_point_kernel(%arg0: i32, %arg1: memref<3x1280xf32, #tpu.memory_space<vmem>>, %arg2: memref<16x3xf32, #tpu.memory_space<vmem>>, %arg3: memref<16x1xf32, #tpu.memory_space<vmem>>, %arg4: memref<20x16xbf16, #tpu.memory_space<vmem>>, %arg5: memref<20x1xf32, #tpu.memory_space<vmem>>, %arg6: memref<20x1280xbf16, #tpu.memory_space<vmem>>) attributes {dimension_semantics = [#tpu.dimension_semantics<parallel>], iteration_bounds = array<i64: 2>, scalar_prefetch = 0 : i64, scratch_operands = 0 : i64, tpu.core_type = #tpu.core_type<tc>, window_params = [{transform_indices = @transform_0, window_bounds = array<i64: 3, 1280>}, {pipeline_mode = #tpu.pipeline_mode<synchronous>, transform_indices = @transform_1, window_bounds = array<i64: 16, 3>}, {pipeline_mode = #tpu.pipeline_mode<synchronous>, transform_indices = @transform_2, window_bounds = array<i64: 16, 1>}, {pipeline_mode = #tpu.pipeline_mode<synchronous>, transform_indices = @transform_3, window_bounds = array<i64: 20, 16>}, {pipeline_mode = #tpu.pipeline_mode<synchronous>, transform_indices = @transform_4, window_bounds = array<i64: 20, 1>}, {transform_indices = @transform_5, window_bounds = array<i64: 20, 1280>}]} {
    %c0 = arith.constant 0 : index
    %c0_0 = arith.constant 0 : index
    %0 = vector.load %arg1[%c0, %c0_0] : memref<3x1280xf32, #tpu.memory_space<vmem>>, vector<3x1280xf32>
    %c0_1 = arith.constant 0 : index
    %c0_2 = arith.constant 0 : index
    %1 = vector.load %arg2[%c0_1, %c0_2] : memref<16x3xf32, #tpu.memory_space<vmem>>, vector<16x3xf32>
    %2 = vector.extract_strided_slice %1 {offsets = [0, 0], sizes = [16, 1], strides = [1, 1]} : vector<16x3xf32> to vector<16x1xf32>
    %3 = vector.extract_strided_slice %0 {offsets = [0, 0], sizes = [1, 1280], strides = [1, 1]} : vector<3x1280xf32> to vector<1x1280xf32>
    %4 = vector.broadcast %2 : vector<16x1xf32> to vector<16x1280xf32>
    %5 = vector.broadcast %3 : vector<1x1280xf32> to vector<16x1280xf32>
    %6 = arith.mulf %4, %5 : vector<16x1280xf32>
    %7 = vector.extract_strided_slice %1 {offsets = [0, 1], sizes = [16, 1], strides = [1, 1]} : vector<16x3xf32> to vector<16x1xf32>
    %8 = vector.extract_strided_slice %0 {offsets = [1, 0], sizes = [1, 1280], strides = [1, 1]} : vector<3x1280xf32> to vector<1x1280xf32>
    %9 = vector.broadcast %7 : vector<16x1xf32> to vector<16x1280xf32>
    %10 = vector.broadcast %8 : vector<1x1280xf32> to vector<16x1280xf32>
    %11 = arith.mulf %9, %10 : vector<16x1280xf32>
    %12 = arith.addf %6, %11 : vector<16x1280xf32>
    %13 = vector.extract_strided_slice %1 {offsets = [0, 2], sizes = [16, 1], strides = [1, 1]} : vector<16x3xf32> to vector<16x1xf32>
    %14 = vector.extract_strided_slice %0 {offsets = [2, 0], sizes = [1, 1280], strides = [1, 1]} : vector<3x1280xf32> to vector<1x1280xf32>
    %15 = vector.broadcast %13 : vector<16x1xf32> to vector<16x1280xf32>
    %16 = vector.broadcast %14 : vector<1x1280xf32> to vector<16x1280xf32>
    %17 = arith.mulf %15, %16 : vector<16x1280xf32>
    %18 = arith.addf %12, %17 : vector<16x1280xf32>
    %c0_3 = arith.constant 0 : index
    %c0_4 = arith.constant 0 : index
    %19 = vector.load %arg3[%c0_3, %c0_4] : memref<16x1xf32, #tpu.memory_space<vmem>>, vector<16x1xf32>
    %20 = vector.broadcast %19 : vector<16x1xf32> to vector<16x1280xf32>
    %21 = arith.addf %18, %20 : vector<16x1280xf32>
    %cst = arith.constant 0.000000e+00 : f32
    %22 = vector.broadcast %cst : f32 to vector<16x1280xf32>
    %23 = arith.maximumf %21, %22 : vector<16x1280xf32>
    %c0_5 = arith.constant 0 : index
    %c0_6 = arith.constant 0 : index
    %24 = vector.load %arg4[%c0_5, %c0_6] : memref<20x16xbf16, #tpu.memory_space<vmem>>, vector<20x16xbf16>
    %25 = arith.truncf %23 : vector<16x1280xf32> to vector<16x1280xbf16>
    %cst_7 = arith.constant dense<0.000000e+00> : vector<20x1280xf32>
    %26 = tpu.matmul %24, %25, %cst_7 {dimension_numbers = #tpu.dot_dimension_numbers<[1], [0], [0], [1], [0, 0, 1, 1], [], []>} : vector<20x16xbf16>, vector<16x1280xbf16>, vector<20x1280xf32> -> vector<20x1280xf32>
    %c0_8 = arith.constant 0 : index
    %c0_9 = arith.constant 0 : index
    %27 = vector.load %arg5[%c0_8, %c0_9] : memref<20x1xf32, #tpu.memory_space<vmem>>, vector<20x1xf32>
    %28 = vector.broadcast %27 : vector<20x1xf32> to vector<20x1280xf32>
    %29 = arith.addf %26, %28 : vector<20x1280xf32>
    %30 = arith.truncf %29 : vector<20x1280xf32> to vector<20x1280xbf16>
    %c0_10 = arith.constant 0 : index
    %c0_11 = arith.constant 0 : index
    %31 = vector.load %arg6[%c0_10, %c0_11] : memref<20x1280xbf16, #tpu.memory_space<vmem>>, vector<20x1280xbf16>
    tpu.vector_store %arg6[%c0_10, %c0_11], %30 {strides = array<i32>} : memref<20x1280xbf16, #tpu.memory_space<vmem>>, vector<20x1280xbf16>,
    return
  }
  func.func @transform_0(%arg0: i32) -> (i32, i32) {
    %c0_i32 = arith.constant 0 : i32
    %c0_i32_0 = arith.constant 0 : i32
    return %c0_i32, %arg0 : i32, i32
  }
  func.func @transform_1(%arg0: i32) -> (i32, i32) {
    %c0_i32 = arith.constant 0 : i32
    %c0_i32_0 = arith.constant 0 : i32
    %c0_i32_1 = arith.constant 0 : i32
    return %c0_i32, %c0_i32_0 : i32, i32
  }
  func.func @transform_2(%arg0: i32) -> (i32, i32) {
    %c0_i32 = arith.constant 0 : i32
    %c0_i32_0 = arith.constant 0 : i32
    %c0_i32_1 = arith.constant 0 : i32
    return %c0_i32, %c0_i32_0 : i32, i32
  }
  func.func @transform_3(%arg0: i32) -> (i32, i32) {
    %c0_i32 = arith.constant 0 : i32
    %c0_i32_0 = arith.constant 0 : i32
    %c0_i32_1 = arith.constant 0 : i32
    return %c0_i32, %c0_i32_0 : i32, i32
  }
  func.func @transform_4(%arg0: i32) -> (i32, i32) {
    %c0_i32 = arith.constant 0 : i32
    %c0_i32_0 = arith.constant 0 : i32
    %c0_i32_1 = arith.constant 0 : i32
    return %c0_i32, %c0_i32_0 : i32, i32
  }
  func.func @transform_5(%arg0: i32) -> (i32, i32) {
    %c0_i32 = arith.constant 0 : i32
    %c0_i32_0 = arith.constant 0 : i32
    return %c0_i32, %arg0 : i32, i32
  }
}

</mosaic_0001>

<llo_original>
// kernel: point_pipeline.1
$region0: #{point_pipeline.1}
  #allocation0 [shape = 'u32[]', space=smem, size = 0x4, offset = 0x4, fixed_abs, tag = 'smem constant byte address 0x4 - core index']
  #allocation1 [shape = 'u32[144,128]{1,0:T(1,128)}', space=vmem, size = 0x12000, scoped, tag = 'internal scratch']
  %s0 = inlined_call_operand.vmem [shape: f32[3,2560], index: 0, kind: input, shape index: {}]
  %s1 = inlined_call_operand.vmem [shape: f32[16,3], index: 1, kind: input, shape index: {}]
  %s2 = inlined_call_operand.vmem [shape: f32[16,1], index: 2, kind: input, shape index: {}]
  %s3 = inlined_call_operand.vmem [shape: bf16[20,16], index: 3, kind: input, shape index: {}]
  %s4 = inlined_call_operand.vmem [shape: f32[20,1], index: 4, kind: input, shape index: {}]
  %s5 = inlined_call_operand.hbm [shape: bf16[20,2560], index: 5, kind: output, shape index: {}]
  %s6 = sld [smem:[#allocation0]]
  $region53: #{point_pipeline.1} parent=0
    _
  %s8 = ssub.s32 1, %s6
  %s9 = scalar_select 0, %s8, %s6
  $region1: #{point_pipeline.1} parent=0
    #allocation2 [shape = 'u8[122880]{0}', space=vmem, size = 0x1e000, scoped, tag = 'output window, operand 0']
    #allocation3 [shape = 's32[2]{0}', space=sflag, size = 0x8, scoped, tag = 'scoped memory for point_pipeline.1']
    %10 = vsyncpa [#allocation3], 0
    %s11 = scalar_lea.sflag [#allocation3], 1
    %12 = vsyncpa %s11, 0
    loop: start=0, step=1, limit=4
    $region2: #{point_pipeline.1} parent=1 // loop_pre_header
      _
    $region3: #{point_pipeline.1} parent=1 // loop_header
      %s14 = sphi 0, %s18
      %p15 = scmp.ge.s32.totalorder %s14, 4
      %s24 = sphi 0, %s26
      %s27 = sphi 0, %s24
      %s28 = sphi 0, %s27
      %s44 = sphi 0, %s28
      %s48 = sphi 0, %s48
      %s50 = sphi 0, %s48
      %s51 = sphi 0, %s50
      %s65 = sphi 0, %s51
      %s69 = sphi 0, %s69
      %s71 = sphi 0, %s69
      %s72 = sphi 0, %s71
      %s86 = sphi 0, %s72
      %s90 = sphi 0, %s90
      %s92 = sphi 0, %s90
      %s93 = sphi 0, %s92
      %s107 = sphi 0, %s93
      %s111 = sphi 0, %s111
      %s113 = sphi 0, %s111
      %s114 = sphi 0, %s113
      %s128 = sphi 0, %s114
      %s134 = sphi 0, %s136
      %s137 = sphi 0, %s134
      %s138 = sphi 0, %s137
      %s154 = sphi 0, %s138
    $region4: #{point_pipeline.1} parent=1 // loop_header_branch
      %17 = sbr.rel (%p15) target = $region8
    $region5: #{point_pipeline.1} parent=1 // loop_body
      %s19 = ssub.s32 %s14, 1
      %s20 = ssub.s32 %s14, 2
      %s21 = sadd.s32 %s14, 1
      %s22 = ssub.s32 %s14, %s21
      %p23 = scmp.eq.s32.totalorder %s22, 0
      %s25 = sadd.s32 %s24, 1
      %s26 = scalar_select %p23, %s24, %s25
      %p29 = pneg %p23
      %p30 = scmp.eq.s32.totalorder %s14, 1
      %p31 = por %p29, %p30
      %p32 = scmp.ne.s32.totalorder %s24, %s27
      %p33 = scmp.eq.s32.totalorder %s14, 0
      %p34 = por %p32, %p33
      %p35 = scmp.ne.s32.totalorder %s24, %s27
      %p36 = scmp.eq.s32.totalorder %s19, 1
      %p37 = por %p35, %p36
      %p38 = scmp.ne.s32.totalorder %s27, %s28
      %p39 = scmp.eq.s32.totalorder %s19, 0
      %p40 = por %p38, %p39
      %p41 = scmp.ne.s32.totalorder %s27, %s28
      %p42 = scmp.eq.s32.totalorder %s20, 1
      %p43 = por %p41, %p42
      %p45 = scmp.ne.s32.totalorder %s28, %s44
      %p46 = scmp.eq.s32.totalorder %s20, 0
      %p47 = por %p45, %p46
      %s49 = sadd.s32 %s48, 1
      %p52 = scmp.eq.s32.totalorder %s14, 1
      %p53 = scmp.ne.s32.totalorder %s48, %s50
      %p54 = scmp.eq.s32.totalorder %s14, 0
      %p55 = por %p53, %p54
      %p56 = scmp.ne.s32.totalorder %s48, %s50
      %p57 = scmp.eq.s32.totalorder %s19, 1
      %p58 = por %p56, %p57
      %p59 = scmp.ne.s32.totalorder %s50, %s51
      %p60 = scmp.eq.s32.totalorder %s19, 0
      %p61 = por %p59, %p60
      %p62 = scmp.ne.s32.totalorder %s50, %s51
      %p63 = scmp.eq.s32.totalorder %s20, 1
      %p64 = por %p62, %p63
      %p66 = scmp.ne.s32.totalorder %s51, %s65
      %p67 = scmp.eq.s32.totalorder %s20, 0
      %p68 = por %p66, %p67
      %s70 = sadd.s32 %s69, 1
      %p73 = scmp.eq.s32.totalorder %s14, 1
      %p74 = scmp.ne.s32.totalorder %s69, %s71
      %p75 = scmp.eq.s32.totalorder %s14, 0
      %p76 = por %p74, %p75
      %p77 = scmp.ne.s32.totalorder %s69, %s71
      %p78 = scmp.eq.s32.totalorder %s19, 1
      %p79 = por %p77, %p78
      %p80 = scmp.ne.s32.totalorder %s71, %s72
      %p81 = scmp.eq.s32.totalorder %s19, 0
      %p82 = por %p80, %p81
      %p83 = scmp.ne.s32.totalorder %s71, %s72
      %p84 = scmp.eq.s32.totalorder %s20, 1
      %p85 = por %p83, %p84
      %p87 = scmp.ne.s32.totalorder %s72, %s86
      %p88 = scmp.eq.s32.totalorder %s20, 0
      %p89 = por %p87, %p88
      %s91 = sadd.s32 %s90, 1
      %p94 = scmp.eq.s32.totalorder %s14, 1
      %p95 = scmp.ne.s32.totalorder %s90, %s92
      %p96 = scmp.eq.s32.totalorder %s14, 0
      %p97 = por %p95, %p96
      %p98 = scmp.ne.s32.totalorder %s90, %s92
      %p99 = scmp.eq.s32.totalorder %s19, 1
      %p100 = por %p98, %p99
      %p101 = scmp.ne.s32.totalorder %s92, %s93
      %p102 = scmp.eq.s32.totalorder %s19, 0
      %p103 = por %p101, %p102
      %p104 = scmp.ne.s32.totalorder %s92, %s93
      %p105 = scmp.eq.s32.totalorder %s20, 1
      %p106 = por %p104, %p105
      %p108 = scmp.ne.s32.totalorder %s93, %s107
      %p109 = scmp.eq.s32.totalorder %s20, 0
      %p110 = por %p108, %p109
      %s112 = sadd.s32 %s111, 1
      %p115 = scmp.eq.s32.totalorder %s14, 1
      %p116 = scmp.ne.s32.totalorder %s111, %s113
      %p117 = scmp.eq.s32.totalorder %s14, 0
      %p118 = por %p116, %p117
      %p119 = scmp.ne.s32.totalorder %s111, %s113
      %p120 = scmp.eq.s32.totalorder %s19, 1
      %p121 = por %p119, %p120
      %p122 = scmp.ne.s32.totalorder %s113, %s114
      %p123 = scmp.eq.s32.totalorder %s19, 0
      %p124 = por %p122, %p123
      %p125 = scmp.ne.s32.totalorder %s113, %s114
      %p126 = scmp.eq.s32.totalorder %s20, 1
      %p127 = por %p125, %p126
      %p129 = scmp.ne.s32.totalorder %s114, %s128
      %p130 = scmp.eq.s32.totalorder %s20, 0
      %p131 = por %p129, %p130
      %s132 = ssub.s32 %s14, %s21
      %p133 = scmp.eq.s32.totalorder %s132, 0
      %s135 = sadd.s32 %s134, 1
      %s136 = scalar_select %p133, %s134, %s135
      %p139 = pneg %p133
      %p140 = scmp.eq.s32.totalorder %s14, 1
      %p141 = por %p139, %p140
      %p142 = scmp.ne.s32.totalorder %s134, %s137
      %p143 = scmp.eq.s32.totalorder %s14, 0
      %p144 = por %p142, %p143
      %p145 = scmp.ne.s32.totalorder %s134, %s137
      %p146 = scmp.eq.s32.totalorder %s19, 1
      %p147 = por %p145, %p146
      %p148 = scmp.ne.s32.totalorder %s137, %s138
      %p149 = scmp.eq.s32.totalorder %s19, 0
      %p150 = por %p148, %p149
      %p151 = scmp.ne.s32.totalorder %s137, %s138
      %p152 = scmp.eq.s32.totalorder %s20, 1
      %p153 = por %p151, %p152
      %p155 = scmp.ne.s32.totalorder %s138, %s154
      %p156 = scmp.eq.s32.totalorder %s20, 0
      %p157 = por %p155, %p156
      %p158 = scmp.le.s32.totalorder 1, %s14
      %p159 = scmp.lt.s32.totalorder %s14, 3
      %p160 = pnand %p158, %p159
      %p161 = pneg %p160
      // Predicated region
      $region9: #{point_pipeline.1} parent=5 // pred_check
        _
      $region10: #{point_pipeline.1} parent=5 // pred_check_branch
        %163 = sbr.rel (%p160) target = $region12
      $region11: #{point_pipeline.1} parent=5 // pred_region
        %s164 = ssub.s32 %s14, 1
        // Predicated region
        $region13: #{point_pipeline.1} parent=11 // pred_check
          %p165 = pneg %p61
        $region14: #{point_pipeline.1} parent=11 // pred_check_branch
          %167 = sbr.rel (%p165) target = $region16
        $region15: #{point_pipeline.1} parent=11 // pred_region
          _
        $region16: #{point_pipeline.1} parent=11 // pred_fallthru
          _
        // Predicated region
        $region17: #{point_pipeline.1} parent=11 // pred_check
          %p168 = pneg %p82
        $region18: #{point_pipeline.1} parent=11 // pred_check_branch
          %170 = sbr.rel (%p168) target = $region20
        $region19: #{point_pipeline.1} parent=11 // pred_region
          _
        $region20: #{point_pipeline.1} parent=11 // pred_fallthru
          _
        // Predicated region
        $region21: #{point_pipeline.1} parent=11 // pred_check
          %p171 = pneg %p103
        $region22: #{point_pipeline.1} parent=11 // pred_check_branch
          %173 = sbr.rel (%p171) target = $region24
        $region23: #{point_pipeline.1} parent=11 // pred_region
          _
        $region24: #{point_pipeline.1} parent=11 // pred_fallthru
          _
        // Predicated region
        $region25: #{point_pipeline.1} parent=11 // pred_check
          %p174 = pneg %p124
        $region26: #{point_pipeline.1} parent=11 // pred_check_branch
          %176 = sbr.rel (%p174) target = $region28
        $region27: #{point_pipeline.1} parent=11 // pred_region
          _
        $region28: #{point_pipeline.1} parent=11 // pred_fallthru
          _
      $region12: #{point_pipeline.1} parent=5 // pred_fallthru
        _
      %p177 = scmp.lt.s32.totalorder %s14, 2
      // Predicated region
      $region29: #{point_pipeline.1} parent=5 // pred_check
        %p178 = pneg %p177
      $region30: #{point_pipeline.1} parent=5 // pred_check_branch
        %180 = sbr.rel (%p178) target = $region32
      $region31: #{point_pipeline.1} parent=5 // pred_region
        // Predicated region
        $region33: #{point_pipeline.1} parent=31 // pred_check
          %p181 = pneg %p34
        $region34: #{point_pipeline.1} parent=31 // pred_check_branch
          %183 = sbr.rel (%p181) target = $region36
        $region35: #{point_pipeline.1} parent=31 // pred_region
          %s184 = smul.u32 10, %s14
          %p185 = scmp.lt.s32.totalorder %s184, 19
          %s186 = scalar_select %p185, %s184, 19
          %s187 = smul.addr %s186, 4
          %s188 = scalar_lea.vmem %s0, %s187
          %s189 = smul.u32 10, %s14
        $region36: #{point_pipeline.1} parent=31 // pred_fallthru
          _
      $region32: #{point_pipeline.1} parent=5 // pred_fallthru
        _
      %p190 = scmp.le.s32.totalorder 1, %s14
      %p191 = scmp.lt.s32.totalorder %s14, 3
      %p192 = pnand %p190, %p191
      %p193 = pneg %p192
      // Predicated region
      $region37: #{point_pipeline.1} parent=5 // pred_check
        _
      $region38: #{point_pipeline.1} parent=5 // pred_check_branch
        %195 = sbr.rel (%p192) target = $region40
      $region39: #{point_pipeline.1} parent=5 // pred_region
        %s196 = ssub.s32 %s14, 1
        %s197 = smul.u32 10, %s19
        %p198 = scmp.lt.s32.totalorder %s197, 19
        %s199 = scalar_select %p198, %s197, 19
        %s200 = smul.addr %s199, 4
        %s201 = scalar_lea.vmem %s0, %s200
        %p202 = pneg %p40
        %p203 = pneg %p37
        %p204 = pneg %p61
        %p205 = pneg %p58
        %p206 = pneg %p82
        %p207 = pneg %p79
        %p208 = pneg %p103
        %p209 = pneg %p100
        %p210 = pneg %p124
        %p211 = pneg %p121
        %p212 = pneg %p150
        %p213 = pneg %p147
        %s214 = sand.u32 %s137, 1
        %s215 = scalar_lea.sflag [#allocation3], %s214
        %s216 = sand.u32 %s137, 1
        %s217 = smul.addr %s216, 120
        %s218 = scalar_lea.vmem [#allocation2], %s217
        %s219 = smul.u32 10, %s19
        %p220 = scmp.lt.s32.totalorder %s219, 19
        %s221 = scalar_select %p220, %s219, 19
        %s222 = smul.addr %s221, 4
        %s223 = scalar_lea.vmem %s0, %s222
        %s224 = smul.u32 10, %s19
        %s225 = smul.u32 10, %s19
        %v227 = vld [vmem:[%s223] sm:$0x77]
        %v228 = vld [vmem:[%s223 + $0x8] sm:$0x77]
        %v229 = vld [vmem:[%s223 + $0x10] sm:$0x77]
        %v230 = vld [vmem:[%s223 + $0x18] sm:$0x77]
        %v231 = vld [vmem:[%s223 + $0x20] sm:$0x77]
        %v232 = vld [vmem:[%s1] sm:$0xff]
        %v233 = vld [vmem:[%s1 + $0x8] sm:$0xff]
        %235 = vset.pattern.permute.xlu0 0
        %236 = vperm.xlu0 %235, %v232
        %v237 = vpop.permute.xlu0 %236
        %240 = vset.pattern.permute.xlu0 0
        %241 = vperm.xlu0 %240, %v233
        %v242 = vpop.permute.xlu0 %241
        %v249 = vlaneseq
        %v250 = vshrl.u32 %v249, 7
        %v251 = vsub.s32 0, %v250
        %v252 = vrot.slane %v227, %v251
        %v253 = vlaneseq
        %v254 = vshrl.u32 %v253, 7
        %v255 = vsub.s32 4, %v254
        %v256 = vrot.slane %v227, %v255
        %v257 = vlaneseq
        %v258 = vshrl.u32 %v257, 7
        %v259 = vsub.s32 0, %v258
        %v260 = vrot.slane %v228, %v259
        %v261 = vlaneseq
        %v262 = vshrl.u32 %v261, 7
        %v263 = vsub.s32 4, %v262
        %v264 = vrot.slane %v228, %v263
        %v265 = vlaneseq
        %v266 = vshrl.u32 %v265, 7
        %v267 = vsub.s32 0, %v266
        %v268 = vrot.slane %v229, %v267
        %v269 = vlaneseq
        %v270 = vshrl.u32 %v269, 7
        %v271 = vsub.s32 4, %v270
        %v272 = vrot.slane %v229, %v271
        %v273 = vlaneseq
        %v274 = vshrl.u32 %v273, 7
        %v275 = vsub.s32 0, %v274
        %v276 = vrot.slane %v230, %v275
        %v277 = vlaneseq
        %v278 = vshrl.u32 %v277, 7
        %v279 = vsub.s32 4, %v278
        %v280 = vrot.slane %v230, %v279
        %v281 = vlaneseq
        %v282 = vshrl.u32 %v281, 7
        %v283 = vsub.s32 0, %v282
        %v284 = vrot.slane %v231, %v283
        %v285 = vlaneseq
        %v286 = vshrl.u32 %v285, 7
        %v287 = vsub.s32 4, %v286
        %v288 = vrot.slane %v231, %v287
        %v299 = vlaneseq
        %v300 = vshrl.u32 %v299, 7
        %v301 = vsub.s32 0, %v300
        %v302 = vrot.slane %v252, %v301
        %v303 = vlaneseq
        %v304 = vshrl.u32 %v303, 7
        %v305 = vsub.s32 0, %v304
        %v306 = vrot.slane %v256, %v305
        %v307 = vlaneseq
        %v308 = vshrl.u32 %v307, 7
        %v309 = vsub.s32 0, %v308
        %v310 = vrot.slane %v260, %v309
        %v311 = vlaneseq
        %v312 = vshrl.u32 %v311, 7
        %v313 = vsub.s32 0, %v312
        %v314 = vrot.slane %v264, %v313
        %v315 = vlaneseq
        %v316 = vshrl.u32 %v315, 7
        %v317 = vsub.s32 0, %v316
        %v318 = vrot.slane %v268, %v317
        %v319 = vlaneseq
        %v320 = vshrl.u32 %v319, 7
        %v321 = vsub.s32 0, %v320
        %v322 = vrot.slane %v272, %v321
        %v323 = vlaneseq
        %v324 = vshrl.u32 %v323, 7
        %v325 = vsub.s32 0, %v324
        %v326 = vrot.slane %v276, %v325
        %v327 = vlaneseq
        %v328 = vshrl.u32 %v327, 7
        %v329 = vsub.s32 0, %v328
        %v330 = vrot.slane %v280, %v329
        %v331 = vlaneseq
        %v332 = vshrl.u32 %v331, 7
        %v333 = vsub.s32 0, %v332
        %v334 = vrot.slane %v284, %v333
        %v335 = vlaneseq
        %v336 = vshrl.u32 %v335, 7
        %v337 = vsub.s32 0, %v336
        %v338 = vrot.slane %v288, %v337
        %v339 = vmul.f32 %v237, %v302
        %v340 = vmul.f32 %v237, %v306
        %v341 = vmul.f32 %v237, %v310
        %v342 = vmul.f32 %v237, %v314
        %v343 = vmul.f32 %v237, %v318
        %v344 = vmul.f32 %v237, %v322
        %v345 = vmul.f32 %v237, %v326
        %v346 = vmul.f32 %v237, %v330
        %v347 = vmul.f32 %v237, %v334
        %v348 = vmul.f32 %v237, %v338
        %v349 = vmul.f32 %v242, %v302
        %v350 = vmul.f32 %v242, %v306
        %v351 = vmul.f32 %v242, %v310
        %v352 = vmul.f32 %v242, %v314
        %v353 = vmul.f32 %v242, %v318
        %v354 = vmul.f32 %v242, %v322
        %v355 = vmul.f32 %v242, %v326
        %v356 = vmul.f32 %v242, %v330
        %v357 = vmul.f32 %v242, %v334
        %v358 = vmul.f32 %v242, %v338
        %359 = vset.pattern.permute.xlu0 1
        %360 = vperm.xlu0 %359, %v232
        %v361 = vpop.permute.xlu0 %360
        %363 = vset.pattern.permute.xlu0 1
        %364 = vperm.xlu0 %363, %v233
        %v365 = vpop.permute.xlu0 %364
        %v367 = vlaneseq
        %v368 = vshrl.u32 %v367, 7
        %v369 = vsub.s32 1, %v368
        %v370 = vrot.slane %v227, %v369
        %v371 = vlaneseq
        %v372 = vshrl.u32 %v371, 7
        %v373 = vsub.s32 5, %v372
        %v374 = vrot.slane %v227, %v373
        %v375 = vlaneseq
        %v376 = vshrl.u32 %v375, 7
        %v377 = vsub.s32 1, %v376
        %v378 = vrot.slane %v228, %v377
        %v379 = vlaneseq
        %v380 = vshrl.u32 %v379, 7
        %v381 = vsub.s32 5, %v380
        %v382 = vrot.slane %v228, %v381
        %v383 = vlaneseq
        %v384 = vshrl.u32 %v383, 7
        %v385 = vsub.s32 1, %v384
        %v386 = vrot.slane %v229, %v385
        %v387 = vlaneseq
        %v388 = vshrl.u32 %v387, 7
        %v389 = vsub.s32 5, %v388
        %v390 = vrot.slane %v229, %v389
        %v391 = vlaneseq
        %v392 = vshrl.u32 %v391, 7
        %v393 = vsub.s32 1, %v392
        %v394 = vrot.slane %v230, %v393
        %v395 = vlaneseq
        %v396 = vshrl.u32 %v395, 7
        %v397 = vsub.s32 5, %v396
        %v398 = vrot.slane %v230, %v397
        %v399 = vlaneseq
        %v400 = vshrl.u32 %v399, 7
        %v401 = vsub.s32 1, %v400
        %v402 = vrot.slane %v231, %v401
        %v403 = vlaneseq
        %v404 = vshrl.u32 %v403, 7
        %v405 = vsub.s32 5, %v404
        %v406 = vrot.slane %v231, %v405
        %v417 = vlaneseq
        %v418 = vshrl.u32 %v417, 7
        %v419 = vsub.s32 1, %v418
        %v420 = vrot.slane %v370, %v419
        %v421 = vlaneseq
        %v422 = vshrl.u32 %v421, 7
        %v423 = vsub.s32 1, %v422
        %v424 = vrot.slane %v374, %v423
        %v425 = vlaneseq
        %v426 = vshrl.u32 %v425, 7
        %v427 = vsub.s32 1, %v426
        %v428 = vrot.slane %v378, %v427
        %v429 = vlaneseq
        %v430 = vshrl.u32 %v429, 7
        %v431 = vsub.s32 1, %v430
        %v432 = vrot.slane %v382, %v431
        %v433 = vlaneseq
        %v434 = vshrl.u32 %v433, 7
        %v435 = vsub.s32 1, %v434
        %v436 = vrot.slane %v386, %v435
        %v437 = vlaneseq
        %v438 = vshrl.u32 %v437, 7
        %v439 = vsub.s32 1, %v438
        %v440 = vrot.slane %v390, %v439
        %v441 = vlaneseq
        %v442 = vshrl.u32 %v441, 7
        %v443 = vsub.s32 1, %v442
        %v444 = vrot.slane %v394, %v443
        %v445 = vlaneseq
        %v446 = vshrl.u32 %v445, 7
        %v447 = vsub.s32 1, %v446
        %v448 = vrot.slane %v398, %v447
        %v449 = vlaneseq
        %v450 = vshrl.u32 %v449, 7
        %v451 = vsub.s32 1, %v450
        %v452 = vrot.slane %v402, %v451
        %v453 = vlaneseq
        %v454 = vshrl.u32 %v453, 7
        %v455 = vsub.s32 1, %v454
        %v456 = vrot.slane %v406, %v455
        %v457 = vmul.f32 %v361, %v420
        %v458 = vmul.f32 %v361, %v424
        %v459 = vmul.f32 %v361, %v428
        %v460 = vmul.f32 %v361, %v432
        %v461 = vmul.f32 %v361, %v436
        %v462 = vmul.f32 %v361, %v440
        %v463 = vmul.f32 %v361, %v444
        %v464 = vmul.f32 %v361, %v448
        %v465 = vmul.f32 %v361, %v452
        %v466 = vmul.f32 %v361, %v456
        %v467 = vmul.f32 %v365, %v420
        %v468 = vmul.f32 %v365, %v424
        %v469 = vmul.f32 %v365, %v428
        %v470 = vmul.f32 %v365, %v432
        %v471 = vmul.f32 %v365, %v436
        %v472 = vmul.f32 %v365, %v440
        %v473 = vmul.f32 %v365, %v444
        %v474 = vmul.f32 %v365, %v448
        %v475 = vmul.f32 %v365, %v452
        %v476 = vmul.f32 %v365, %v456
        %v477 = vadd.f32 %v339, %v457
        %v478 = vadd.f32 %v340, %v458
        %v479 = vadd.f32 %v341, %v459
        %v480 = vadd.f32 %v342, %v460
        %v481 = vadd.f32 %v343, %v461
        %v482 = vadd.f32 %v344, %v462
        %v483 = vadd.f32 %v345, %v463
        %v484 = vadd.f32 %v346, %v464
        %v485 = vadd.f32 %v347, %v465
        %v486 = vadd.f32 %v348, %v466
        %v487 = vadd.f32 %v349, %v467
        %v488 = vadd.f32 %v350, %v468
        %v489 = vadd.f32 %v351, %v469
        %v490 = vadd.f32 %v352, %v470
        %v491 = vadd.f32 %v353, %v471
        %v492 = vadd.f32 %v354, %v472
        %v493 = vadd.f32 %v355, %v473
        %v494 = vadd.f32 %v356, %v474
        %v495 = vadd.f32 %v357, %v475
        %v496 = vadd.f32 %v358, %v476
        %497 = vset.pattern.permute.xlu0 2
        %498 = vperm.xlu0 %497, %v232
        %v499 = vpop.permute.xlu0 %498
        %501 = vset.pattern.permute.xlu0 2
        %502 = vperm.xlu0 %501, %v233
        %v503 = vpop.permute.xlu0 %502
        %v505 = vlaneseq
        %v506 = vshrl.u32 %v505, 7
        %v507 = vsub.s32 2, %v506
        %v508 = vrot.slane %v227, %v507
        %v509 = vlaneseq
        %v510 = vshrl.u32 %v509, 7
        %v511 = vsub.s32 6, %v510
        %v512 = vrot.slane %v227, %v511
        %v513 = vlaneseq
        %v514 = vshrl.u32 %v513, 7
        %v515 = vsub.s32 2, %v514
        %v516 = vrot.slane %v228, %v515
        %v517 = vlaneseq
        %v518 = vshrl.u32 %v517, 7
        %v519 = vsub.s32 6, %v518
        %v520 = vrot.slane %v228, %v519
        %v521 = vlaneseq
        %v522 = vshrl.u32 %v521, 7
        %v523 = vsub.s32 2, %v522
        %v524 = vrot.slane %v229, %v523
        %v525 = vlaneseq
        %v526 = vshrl.u32 %v525, 7
        %v527 = vsub.s32 6, %v526
        %v528 = vrot.slane %v229, %v527
        %v529 = vlaneseq
        %v530 = vshrl.u32 %v529, 7
        %v531 = vsub.s32 2, %v530
        %v532 = vrot.slane %v230, %v531
        %v533 = vlaneseq
        %v534 = vshrl.u32 %v533, 7
        %v535 = vsub.s32 6, %v534
        %v536 = vrot.slane %v230, %v535
        %v537 = vlaneseq
        %v538 = vshrl.u32 %v537, 7
        %v539 = vsub.s32 2, %v538
        %v540 = vrot.slane %v231, %v539
        %v541 = vlaneseq
        %v542 = vshrl.u32 %v541, 7
        %v543 = vsub.s32 6, %v542
        %v544 = vrot.slane %v231, %v543
        %v555 = vlaneseq
        %v556 = vshrl.u32 %v555, 7
        %v557 = vsub.s32 2, %v556
        %v558 = vrot.slane %v508, %v557
        %v559 = vlaneseq
        %v560 = vshrl.u32 %v559, 7
        %v561 = vsub.s32 2, %v560
        %v562 = vrot.slane %v512, %v561
        %v563 = vlaneseq
        %v564 = vshrl.u32 %v563, 7
        %v565 = vsub.s32 2, %v564
        %v566 = vrot.slane %v516, %v565
        %v567 = vlaneseq
        %v568 = vshrl.u32 %v567, 7
        %v569 = vsub.s32 2, %v568
        %v570 = vrot.slane %v520, %v569
        %v571 = vlaneseq
        %v572 = vshrl.u32 %v571, 7
        %v573 = vsub.s32 2, %v572
        %v574 = vrot.slane %v524, %v573
        %v575 = vlaneseq
        %v576 = vshrl.u32 %v575, 7
        %v577 = vsub.s32 2, %v576
        %v578 = vrot.slane %v528, %v577
        %v579 = vlaneseq
        %v580 = vshrl.u32 %v579, 7
        %v581 = vsub.s32 2, %v580
        %v582 = vrot.slane %v532, %v581
        %v583 = vlaneseq
        %v584 = vshrl.u32 %v583, 7
        %v585 = vsub.s32 2, %v584
        %v586 = vrot.slane %v536, %v585
        %v587 = vlaneseq
        %v588 = vshrl.u32 %v587, 7
        %v589 = vsub.s32 2, %v588
        %v590 = vrot.slane %v540, %v589
        %v591 = vlaneseq
        %v592 = vshrl.u32 %v591, 7
        %v593 = vsub.s32 2, %v592
        %v594 = vrot.slane %v544, %v593
        %v595 = vmul.f32 %v499, %v558
        %v596 = vmul.f32 %v499, %v562
        %v597 = vmul.f32 %v499, %v566
        %v598 = vmul.f32 %v499, %v570
        %v599 = vmul.f32 %v499, %v574
        %v600 = vmul.f32 %v499, %v578
        %v601 = vmul.f32 %v499, %v582
        %v602 = vmul.f32 %v499, %v586
        %v603 = vmul.f32 %v499, %v590
        %v604 = vmul.f32 %v499, %v594
        %v605 = vmul.f32 %v503, %v558
        %v606 = vmul.f32 %v503, %v562
        %v607 = vmul.f32 %v503, %v566
        %v608 = vmul.f32 %v503, %v570
        %v609 = vmul.f32 %v503, %v574
        %v610 = vmul.f32 %v503, %v578
        %v611 = vmul.f32 %v503, %v582
        %v612 = vmul.f32 %v503, %v586
        %v613 = vmul.f32 %v503, %v590
        %v614 = vmul.f32 %v503, %v594
        %v615 = vadd.f32 %v477, %v595
        %v616 = vadd.f32 %v478, %v596
        %v617 = vadd.f32 %v479, %v597
        %v618 = vadd.f32 %v480, %v598
        %v619 = vadd.f32 %v481, %v599
        %v620 = vadd.f32 %v482, %v600
        %v621 = vadd.f32 %v483, %v601
        %v622 = vadd.f32 %v484, %v602
        %v623 = vadd.f32 %v485, %v603
        %v624 = vadd.f32 %v486, %v604
        %v625 = vadd.f32 %v487, %v605
        %v626 = vadd.f32 %v488, %v606
        %v627 = vadd.f32 %v489, %v607
        %v628 = vadd.f32 %v490, %v608
        %v629 = vadd.f32 %v491, %v609
        %v630 = vadd.f32 %v492, %v610
        %v631 = vadd.f32 %v493, %v611
        %v632 = vadd.f32 %v494, %v612
        %v633 = vadd.f32 %v495, %v613
        %v634 = vadd.f32 %v496, %v614
        %v635 = vld [vmem:[%s2] sm:$0xff]
        %v636 = vld [vmem:[%s2 + $0x8] sm:$0xff]
        %638 = vset.pattern.permute.xlu0 0
        %639 = vperm.xlu0 %638, %v635
        %v640 = vpop.permute.xlu0 %639
        %643 = vset.pattern.permute.xlu0 0
        %644 = vperm.xlu0 %643, %v636
        %v645 = vpop.permute.xlu0 %644
        %v647 = vadd.f32 %v615, %v640
        %v648 = vadd.f32 %v616, %v640
        %v649 = vadd.f32 %v617, %v640
        %v650 = vadd.f32 %v618, %v640
        %v651 = vadd.f32 %v619, %v640
        %v652 = vadd.f32 %v620, %v640
        %v653 = vadd.f32 %v621, %v640
        %v654 = vadd.f32 %v622, %v640
        %v655 = vadd.f32 %v623, %v640
        %v656 = vadd.f32 %v624, %v640
        %v657 = vadd.f32 %v625, %v645
        %v658 = vadd.f32 %v626, %v645
        %v659 = vadd.f32 %v627, %v645
        %v660 = vadd.f32 %v628, %v645
        %v661 = vadd.f32 %v629, %v645
        %v662 = vadd.f32 %v630, %v645
        %v663 = vadd.f32 %v631, %v645
        %v664 = vadd.f32 %v632, %v645
        %v665 = vadd.f32 %v633, %v645
        %v666 = vadd.f32 %v634, %v645
        %v667 = vmax.f32 %v647, 0.0
        %v668 = vmax.f32 %v648, 0.0
        %v669 = vmax.f32 %v649, 0.0
        %v670 = vmax.f32 %v650, 0.0
        %v671 = vmax.f32 %v651, 0.0
        %v672 = vmax.f32 %v652, 0.0
        %v673 = vmax.f32 %v653, 0.0
        %v674 = vmax.f32 %v654, 0.0
        %v675 = vmax.f32 %v655, 0.0
        %v676 = vmax.f32 %v656, 0.0
        %v677 = vmax.f32 %v657, 0.0
        %v678 = vmax.f32 %v658, 0.0
        %v679 = vmax.f32 %v659, 0.0
        %v680 = vmax.f32 %v660, 0.0
        %v681 = vmax.f32 %v661, 0.0
        %v682 = vmax.f32 %v662, 0.0
        %v683 = vmax.f32 %v663, 0.0
        %v684 = vmax.f32 %v664, 0.0
        %v685 = vmax.f32 %v665, 0.0
        %v686 = vmax.f32 %v666, 0.0
        %v687 = vld [vmem:[%s3] sm:$0xf]
        %v688 = vld [vmem:[%s3 + $0x4] sm:$0xf]
        %v689 = vld [vmem:[%s3 + $0x8] sm:$0x3]
        %v690 = vpack.c.bf16 %v677, %v667
        %v691 = vpack.c.bf16 %v678, %v668
        %v692 = vpack.c.bf16 %v679, %v669
        %v693 = vpack.c.bf16 %v680, %v670
        %v694 = vpack.c.bf16 %v681, %v671
        %v695 = vpack.c.bf16 %v682, %v672
        %v696 = vpack.c.bf16 %v683, %v673
        %v697 = vpack.c.bf16 %v684, %v674
        %v698 = vpack.c.bf16 %v685, %v675
        %v699 = vpack.c.bf16 %v686, %v676
        %v700 = vld [vmem:[%s4] sm:$0xff]
        %v701 = vld [vmem:[%s4 + $0x8] sm:$0xff]
        %v702 = vld [vmem:[%s4 + $0x10] sm:$0xf]
        %704 = vset.pattern.permute.xlu0 0
        %705 = vperm.xlu0 %704, %v700
        %v706 = vpop.permute.xlu0 %705
        %709 = vset.pattern.permute.xlu0 0
        %710 = vperm.xlu0 %709, %v701
        %v711 = vpop.permute.xlu0 %710
        %714 = vset.pattern.permute.xlu0 0
        %715 = vperm.xlu0 %714, %v702
        %v716 = vpop.permute.xlu0 %715
        %v721 = vunpack.c.l.b16 %v687
        %v722 = vunpack.c.l.b16 %v688
        %v723 = vunpack.c.l.b16 %v689
        %v724 = vpack.c.b16 %v722, %v721
        %v725 = vpack.c.b16 %v723, %v723
        %vm726 = vcmask 130048
        %v728 = vsel %vm726, %v724, 0
        %v731 = vsel %vm726, %v725, 0
        %733 = vmatprep.subr.bf16.mxu0 %v691
        %734 = vmatpush1.bf16.msra.mxu0 %v690
        %735 = vmatprep.subr.bf16.mxu0 0
        %736 = vmatpush1.bf16.msra.mxu0 0
        %737 = vmatprep.subr.bf16.mxu0 0
        %738 = vmatpush1.bf16.msra.mxu0 0
        %739 = vmatprep.subr.bf16.mxu0 0
        %740 = vmatpush1.bf16.msra.mxu0 0
        %741 = vmatprep.subr.bf16.mxu0 0
        %742 = vmatpush1.bf16.msra.mxu0 0
        %743 = vmatprep.subr.bf16.mxu0 0
        %744 = vmatpush1.bf16.msra.mxu0 0
        %745 = vmatprep.subr.bf16.mxu0 0
        %746 = vmatpush1.bf16.msra.mxu0 0
        %747 = vmatprep.subr.bf16.mxu0 0
        %748 = vmatpush1.bf16.msra.mxu0 0
        %749 = vmatprep.subr.bf16.mxu0 0
        %750 = vmatpush1.bf16.msra.mxu0 0
        %751 = vmatprep.subr.bf16.mxu0 0
        %752 = vmatpush1.bf16.msra.mxu0 0
        %753 = vmatprep.subr.bf16.mxu0 0
        %754 = vmatpush1.bf16.msra.mxu0 0
        %755 = vmatprep.subr.bf16.mxu0 0
        %756 = vmatpush1.bf16.msra.mxu0 0
        %757 = vmatprep.subr.bf16.mxu0 0
        %758 = vmatpush1.bf16.msra.mxu0 0
        %759 = vmatprep.subr.bf16.mxu0 0
        %760 = vmatpush1.bf16.msra.mxu0 0
        %761 = vmatprep.subr.bf16.mxu0 0
        %762 = vmatpush1.bf16.msra.mxu0 0
        %763 = vmatprep.subr.bf16.mxu0 0
        %764 = vmatpush1.bf16.msra.mxu0 0
        %765 = vmatprep.mubr.bf16.mxu0 0
        %766 = vmatmul.mubr.bf16.gmra.mrb[0].mxu0 %v728
        %v767 = vpop.f32.mrb[0].mxu0
        %v768 = vadd.f32 %v706, %v767
        %v769 = vpop.f32.mrb[0].mxu0
        %v770 = vadd.f32 %v706, %v769
        %v771 = vpop.f32.mrb[0].mxu0
        %v772 = vadd.f32 %v711, %v771
        %v773 = vpop.f32.mrb[0].mxu0
        %v774 = vadd.f32 %v711, %v773
        %775 = vmatprep.mubr.bf16.mxu0 0
        %776 = vmatmul.mubr.bf16.gmra.mrb[0].mxu0 %v731
        %v777 = vpop.f32.mrb[0].mxu0
        %v778 = vadd.f32 %v716, %v777
        %v779 = vpop.f32.mrb[0].mxu0
        %v780 = vadd.f32 %v716, %v779
        %v781 = vpop.f32.mrb[0].mxu0
        %v782 = vpop.f32.mrb[0].mxu0
        %783 = vdwg.mxu0
        %784 = vmatprep.subr.bf16.mxu0 %v693
        %785 = vmatpush1.bf16.msra.mxu0 %v692
        %786 = vmatprep.subr.bf16.mxu0 0
        %787 = vmatpush1.bf16.msra.mxu0 0
        %788 = vmatprep.subr.bf16.mxu0 0
        %789 = vmatpush1.bf16.msra.mxu0 0
        %790 = vmatprep.subr.bf16.mxu0 0
        %791 = vmatpush1.bf16.msra.mxu0 0
        %792 = vmatprep.subr.bf16.mxu0 0
        %793 = vmatpush1.bf16.msra.mxu0 0
        %794 = vmatprep.subr.bf16.mxu0 0
        %795 = vmatpush1.bf16.msra.mxu0 0
        %796 = vmatprep.subr.bf16.mxu0 0
        %797 = vmatpush1.bf16.msra.mxu0 0
        %798 = vmatprep.subr.bf16.mxu0 0
        %799 = vmatpush1.bf16.msra.mxu0 0
        %800 = vmatprep.subr.bf16.mxu0 0
        %801 = vmatpush1.bf16.msra.mxu0 0
        %802 = vmatprep.subr.bf16.mxu0 0
        %803 = vmatpush1.bf16.msra.mxu0 0
        %804 = vmatprep.subr.bf16.mxu0 0
        %805 = vmatpush1.bf16.msra.mxu0 0
        %806 = vmatprep.subr.bf16.mxu0 0
        %807 = vmatpush1.bf16.msra.mxu0 0
        %808 = vmatprep.subr.bf16.mxu0 0
        %809 = vmatpush1.bf16.msra.mxu0 0
        %810 = vmatprep.subr.bf16.mxu0 0
        %811 = vmatpush1.bf16.msra.mxu0 0
        %812 = vmatprep.subr.bf16.mxu0 0
        %813 = vmatpush1.bf16.msra.mxu0 0
        %814 = vmatprep.subr.bf16.mxu0 0
        %815 = vmatpush1.bf16.msra.mxu0 0
        %816 = vmatprep.mubr.bf16.mxu0 0
        %817 = vmatmul.mubr.bf16.gmra.mrb[0].mxu0 %v728
        %v818 = vpop.f32.mrb[0].mxu0
        %v819 = vadd.f32 %v706, %v818
        %v820 = vpop.f32.mrb[0].mxu0
        %v821 = vadd.f32 %v706, %v820
        %v822 = vpop.f32.mrb[0].mxu0
        %v823 = vadd.f32 %v711, %v822
        %v824 = vpop.f32.mrb[0].mxu0
        %v825 = vadd.f32 %v711, %v824
        %826 = vmatprep.mubr.bf16.mxu0 0
        %827 = vmatmul.mubr.bf16.gmra.mrb[0].mxu0 %v731
        %v828 = vpop.f32.mrb[0].mxu0
        %v829 = vadd.f32 %v716, %v828
        %v830 = vpop.f32.mrb[0].mxu0
        %v831 = vadd.f32 %v716, %v830
        %v832 = vpop.f32.mrb[0].mxu0
        %v833 = vpop.f32.mrb[0].mxu0
        %834 = vdwg.mxu0
        %835 = vmatprep.subr.bf16.mxu0 %v695
        %836 = vmatpush1.bf16.msra.mxu0 %v694
        %837 = vmatprep.subr.bf16.mxu0 0
        %838 = vmatpush1.bf16.msra.mxu0 0
        %839 = vmatprep.subr.bf16.mxu0 0
        %840 = vmatpush1.bf16.msra.mxu0 0
        %841 = vmatprep.subr.bf16.mxu0 0
        %842 = vmatpush1.bf16.msra.mxu0 0
        %843 = vmatprep.subr.bf16.mxu0 0
        %844 = vmatpush1.bf16.msra.mxu0 0
        %845 = vmatprep.subr.bf16.mxu0 0
        %846 = vmatpush1.bf16.msra.mxu0 0
        %847 = vmatprep.subr.bf16.mxu0 0
        %848 = vmatpush1.bf16.msra.mxu0 0
        %849 = vmatprep.subr.bf16.mxu0 0
        %850 = vmatpush1.bf16.msra.mxu0 0
        %851 = vmatprep.subr.bf16.mxu0 0
        %852 = vmatpush1.bf16.msra.mxu0 0
        %853 = vmatprep.subr.bf16.mxu0 0
        %854 = vmatpush1.bf16.msra.mxu0 0
        %855 = vmatprep.subr.bf16.mxu0 0
        %856 = vmatpush1.bf16.msra.mxu0 0
        %857 = vmatprep.subr.bf16.mxu0 0
        %858 = vmatpush1.bf16.msra.mxu0 0
        %859 = vmatprep.subr.bf16.mxu0 0
        %860 = vmatpush1.bf16.msra.mxu0 0
        %861 = vmatprep.subr.bf16.mxu0 0
        %862 = vmatpush1.bf16.msra.mxu0 0
        %863 = vmatprep.subr.bf16.mxu0 0
        %864 = vmatpush1.bf16.msra.mxu0 0
        %865 = vmatprep.subr.bf16.mxu0 0
        %866 = vmatpush1.bf16.msra.mxu0 0
        %867 = vmatprep.mubr.bf16.mxu0 0
        %868 = vmatmul.mubr.bf16.gmra.mrb[0].mxu0 %v728
        %v869 = vpop.f32.mrb[0].mxu0
        %v870 = vadd.f32 %v706, %v869
        %v871 = vpop.f32.mrb[0].mxu0
        %v872 = vadd.f32 %v706, %v871
        %v873 = vpop.f32.mrb[0].mxu0
        %v874 = vadd.f32 %v711, %v873
        %v875 = vpop.f32.mrb[0].mxu0
        %v876 = vadd.f32 %v711, %v875
        %877 = vmatprep.mubr.bf16.mxu0 0
        %878 = vmatmul.mubr.bf16.gmra.mrb[0].mxu0 %v731
        %v879 = vpop.f32.mrb[0].mxu0
        %v880 = vadd.f32 %v716, %v879
        %v881 = vpop.f32.mrb[0].mxu0
        %v882 = vadd.f32 %v716, %v881
        %v883 = vpop.f32.mrb[0].mxu0
        %v884 = vpop.f32.mrb[0].mxu0
        %885 = vdwg.mxu0
        %886 = vmatprep.subr.bf16.mxu0 %v697
        %887 = vmatpush1.bf16.msra.mxu0 %v696
        %888 = vmatprep.subr.bf16.mxu0 0
        %889 = vmatpush1.bf16.msra.mxu0 0
        %890 = vmatprep.subr.bf16.mxu0 0
        %891 = vmatpush1.bf16.msra.mxu0 0
        %892 = vmatprep.subr.bf16.mxu0 0
        %893 = vmatpush1.bf16.msra.mxu0 0
        %894 = vmatprep.subr.bf16.mxu0 0
        %895 = vmatpush1.bf16.msra.mxu0 0
        %896 = vmatprep.subr.bf16.mxu0 0
        %897 = vmatpush1.bf16.msra.mxu0 0
        %898 = vmatprep.subr.bf16.mxu0 0
        %899 = vmatpush1.bf16.msra.mxu0 0
        %900 = vmatprep.subr.bf16.mxu0 0
        %901 = vmatpush1.bf16.msra.mxu0 0
        %902 = vmatprep.subr.bf16.mxu0 0
        %903 = vmatpush1.bf16.msra.mxu0 0
        %904 = vmatprep.subr.bf16.mxu0 0
        %905 = vmatpush1.bf16.msra.mxu0 0
        %906 = vmatprep.subr.bf16.mxu0 0
        %907 = vmatpush1.bf16.msra.mxu0 0
        %908 = vmatprep.subr.bf16.mxu0 0
        %909 = vmatpush1.bf16.msra.mxu0 0
        %910 = vmatprep.subr.bf16.mxu0 0
        %911 = vmatpush1.bf16.msra.mxu0 0
        %912 = vmatprep.subr.bf16.mxu0 0
        %913 = vmatpush1.bf16.msra.mxu0 0
        %914 = vmatprep.subr.bf16.mxu0 0
        %915 = vmatpush1.bf16.msra.mxu0 0
        %916 = vmatprep.subr.bf16.mxu0 0
        %917 = vmatpush1.bf16.msra.mxu0 0
        %918 = vmatprep.mubr.bf16.mxu0 0
        %919 = vmatmul.mubr.bf16.gmra.mrb[0].mxu0 %v728
        %v920 = vpop.f32.mrb[0].mxu0
        %v921 = vadd.f32 %v706, %v920
        %v922 = vpop.f32.mrb[0].mxu0
        %v923 = vadd.f32 %v706, %v922
        %v924 = vpop.f32.mrb[0].mxu0
        %v925 = vadd.f32 %v711, %v924
        %v926 = vpop.f32.mrb[0].mxu0
        %v927 = vadd.f32 %v711, %v926
        %928 = vmatprep.mubr.bf16.mxu0 0
        %929 = vmatmul.mubr.bf16.gmra.mrb[0].mxu0 %v731
        %v930 = vpop.f32.mrb[0].mxu0
        %v931 = vadd.f32 %v716, %v930
        %v932 = vpop.f32.mrb[0].mxu0
        %v933 = vadd.f32 %v716, %v932
        %v934 = vpop.f32.mrb[0].mxu0
        %v935 = vpop.f32.mrb[0].mxu0
        %936 = vdwg.mxu0
        %937 = vmatprep.subr.bf16.mxu0 %v699
        %938 = vmatpush1.bf16.msra.mxu0 %v698
        %939 = vmatprep.subr.bf16.mxu0 0
        %940 = vmatpush1.bf16.msra.mxu0 0
        %941 = vmatprep.subr.bf16.mxu0 0
        %942 = vmatpush1.bf16.msra.mxu0 0
        %943 = vmatprep.subr.bf16.mxu0 0
        %944 = vmatpush1.bf16.msra.mxu0 0
        %945 = vmatprep.subr.bf16.mxu0 0
        %946 = vmatpush1.bf16.msra.mxu0 0
        %947 = vmatprep.subr.bf16.mxu0 0
        %948 = vmatpush1.bf16.msra.mxu0 0
        %949 = vmatprep.subr.bf16.mxu0 0
        %950 = vmatpush1.bf16.msra.mxu0 0
        %951 = vmatprep.subr.bf16.mxu0 0
        %952 = vmatpush1.bf16.msra.mxu0 0
        %953 = vmatprep.subr.bf16.mxu0 0
        %954 = vmatpush1.bf16.msra.mxu0 0
        %955 = vmatprep.subr.bf16.mxu0 0
        %956 = vmatpush1.bf16.msra.mxu0 0
        %957 = vmatprep.subr.bf16.mxu0 0
        %958 = vmatpush1.bf16.msra.mxu0 0
        %959 = vmatprep.subr.bf16.mxu0 0
        %960 = vmatpush1.bf16.msra.mxu0 0
        %961 = vmatprep.subr.bf16.mxu0 0
        %962 = vmatpush1.bf16.msra.mxu0 0
        %963 = vmatprep.subr.bf16.mxu0 0
        %964 = vmatpush1.bf16.msra.mxu0 0
        %965 = vmatprep.subr.bf16.mxu0 0
        %966 = vmatpush1.bf16.msra.mxu0 0
        %967 = vmatprep.subr.bf16.mxu0 0
        %968 = vmatpush1.bf16.msra.mxu0 0
        %969 = vmatprep.mubr.bf16.mxu0 0
        %970 = vmatmul.mubr.bf16.gmra.mrb[0].mxu0 %v728
        %v971 = vpop.f32.mrb[0].mxu0
        %v972 = vadd.f32 %v706, %v971
        %v973 = vpop.f32.mrb[0].mxu0
        %v974 = vadd.f32 %v706, %v973
        %v975 = vpop.f32.mrb[0].mxu0
        %v976 = vadd.f32 %v711, %v975
        %v977 = vpop.f32.mrb[0].mxu0
        %v978 = vadd.f32 %v711, %v977
        %979 = vmatprep.mubr.bf16.mxu0 0
        %980 = vmatmul.mubr.bf16.gmra.mrb[0].mxu0 %v731
        %v981 = vpop.f32.mrb[0].mxu0
        %v982 = vadd.f32 %v716, %v981
        %v983 = vpop.f32.mrb[0].mxu0
        %v984 = vadd.f32 %v716, %v983
        %v985 = vpop.f32.mrb[0].mxu0
        %v986 = vpop.f32.mrb[0].mxu0
        %987 = vdwg.mxu0
        %v988 = vpack.c.bf16 %v772, %v768
        %v989 = vpack.c.bf16 %v774, %v770
        %v990 = vpack.c.bf16 %v823, %v819
        %v991 = vpack.c.bf16 %v825, %v821
        %v992 = vpack.c.bf16 %v874, %v870
        %v993 = vpack.c.bf16 %v876, %v872
        %v994 = vpack.c.bf16 %v925, %v921
        %v995 = vpack.c.bf16 %v927, %v923
        %v996 = vpack.c.bf16 %v976, %v972
        %v997 = vpack.c.bf16 %v978, %v974
        %v998 = vpack.c.bf16 %v778, %v778
        %v999 = vpack.c.bf16 %v780, %v780
        %v1000 = vpack.c.bf16 %v829, %v829
        %v1001 = vpack.c.bf16 %v831, %v831
        %v1002 = vpack.c.bf16 %v880, %v880
        %v1003 = vpack.c.bf16 %v882, %v882
        %v1004 = vpack.c.bf16 %v931, %v931
        %v1005 = vpack.c.bf16 %v933, %v933
        %v1006 = vpack.c.bf16 %v982, %v982
        %v1007 = vpack.c.bf16 %v984, %v984
        %v1028 = vunpack.c.l.b16 %v988
        %v1029 = vunpack.c.l.b16 %v989
        %v1030 = vunpack.c.l.b16 %v990
        %v1031 = vunpack.c.l.b16 %v991
        %v1032 = vunpack.c.l.b16 %v992
        %v1033 = vunpack.c.l.b16 %v993
        %v1034 = vunpack.c.l.b16 %v994
        %v1035 = vunpack.c.l.b16 %v995
        %v1036 = vunpack.c.l.b16 %v996
        %v1037 = vunpack.c.l.b16 %v997
        %v1038 = vunpack.c.h.b16 %v988
        %v1039 = vunpack.c.h.b16 %v989
        %v1040 = vunpack.c.h.b16 %v990
        %v1041 = vunpack.c.h.b16 %v991
        %v1042 = vunpack.c.h.b16 %v992
        %v1043 = vunpack.c.h.b16 %v993
        %v1044 = vunpack.c.h.b16 %v994
        %v1045 = vunpack.c.h.b16 %v995
        %v1046 = vunpack.c.h.b16 %v996
        %v1047 = vunpack.c.h.b16 %v997
        %v1048 = vunpack.c.l.b16 %v998
        %v1049 = vunpack.c.l.b16 %v999
        %v1050 = vunpack.c.l.b16 %v1000
        %v1051 = vunpack.c.l.b16 %v1001
        %v1052 = vunpack.c.l.b16 %v1002
        %v1053 = vunpack.c.l.b16 %v1003
        %v1054 = vunpack.c.l.b16 %v1004
        %v1055 = vunpack.c.l.b16 %v1005
        %v1056 = vunpack.c.l.b16 %v1006
        %v1057 = vunpack.c.l.b16 %v1007
        %v1058 = vpack.c.b16 %v1029, %v1028
        %v1059 = vpack.c.b16 %v1031, %v1030
        %v1060 = vpack.c.b16 %v1033, %v1032
        %v1061 = vpack.c.b16 %v1035, %v1034
        %v1062 = vpack.c.b16 %v1037, %v1036
        %v1063 = vpack.c.b16 %v1039, %v1038
        %v1064 = vpack.c.b16 %v1041, %v1040
        %v1065 = vpack.c.b16 %v1043, %v1042
        %v1066 = vpack.c.b16 %v1045, %v1044
        %v1067 = vpack.c.b16 %v1047, %v1046
        %v1068 = vpack.c.b16 %v1049, %v1048
        %v1069 = vpack.c.b16 %v1051, %v1050
        %v1070 = vpack.c.b16 %v1053, %v1052
        %v1071 = vpack.c.b16 %v1055, %v1054
        %v1072 = vpack.c.b16 %v1057, %v1056
        %1088 = vst [vmem:[%s218] sm:$0xff] %v1058
        %1089 = vst [vmem:[%s218 + $0x8] sm:$0xff] %v1059
        %1090 = vst [vmem:[%s218 + $0x10] sm:$0xff] %v1060
        %1091 = vst [vmem:[%s218 + $0x18] sm:$0xff] %v1061
        %1092 = vst [vmem:[%s218 + $0x20] sm:$0xff] %v1062
        %1093 = vst [vmem:[%s218 + $0x28] sm:$0xff] %v1063
        %1094 = vst [vmem:[%s218 + $0x30] sm:$0xff] %v1064
        %1095 = vst [vmem:[%s218 + $0x38] sm:$0xff] %v1065
        %1096 = vst [vmem:[%s218 + $0x40] sm:$0xff] %v1066
        %1097 = vst [vmem:[%s218 + $0x48] sm:$0xff] %v1067
        %1098 = vst [vmem:[%s218 + $0x50] sm:$0x33] %v1068
        %1099 = vst [vmem:[%s218 + $0x58] sm:$0x33] %v1069
        %1100 = vst [vmem:[%s218 + $0x60] sm:$0x33] %v1070
        %1101 = vst [vmem:[%s218 + $0x68] sm:$0x33] %v1071
        %1102 = vst [vmem:[%s218 + $0x70] sm:$0x33] %v1072
        %s1103 = sand.u32 %s137, 1
        %s1104 = scalar_lea.sflag [#allocation3], %s1103
        %s1105 = sand.u32 %s137, 1
        %s1106 = smul.addr %s1105, 120
        %s1107 = scalar_lea.vmem [#allocation2], %s1106
        // Predicated region
        $region41: #{point_pipeline.1} parent=39 // pred_check
          %p1108 = pneg %p147
        $region42: #{point_pipeline.1} parent=39 // pred_check_branch
          %1110 = sbr.rel (%p1108) target = $region44
        $region43: #{point_pipeline.1} parent=39 // pred_region
          %s1111 = smul.u32 10, %s19
          %s1113 = ssub.s32 1920, 1920
          %1114 = vsyncadd %s1104, %s1113
          %s1115 = smul.addr %s1111, 64
          %s1116 = scalar_lea.hbm %s5, %s1115
          %s1117 = sshll.u32 %s1107, 4
          %s1118 = int_to_ptr.vmem [resolvable:$true] %s1117
          %1123 = dma.vmem_to_hbm [thread:$0]  %s1118, 1920, %s1116, %s1104, 640, 1280, 40
        $region44: #{point_pipeline.1} parent=39 // pred_fallthru
          _
      $region40: #{point_pipeline.1} parent=5 // pred_fallthru
        _
      %p1124 = scmp.le.s32.totalorder 2, %s14
      // Predicated region
      $region45: #{point_pipeline.1} parent=5 // pred_check
        %p1125 = pneg %p1124
      $region46: #{point_pipeline.1} parent=5 // pred_check_branch
        %1127 = sbr.rel (%p1125) target = $region48
      $region47: #{point_pipeline.1} parent=5 // pred_region
        %s1128 = ssub.s32 %s14, 2
        // Predicated region
        $region49: #{point_pipeline.1} parent=47 // pred_check
          %p1129 = pneg %p153
        $region50: #{point_pipeline.1} parent=47 // pred_check_branch
          %1131 = sbr.rel (%p1129) target = $region52
        $region51: #{point_pipeline.1} parent=47 // pred_region
          %s1132 = sand.u32 %s138, 1
          %s1133 = scalar_lea.sflag [#allocation3], %s1132
          %s1134 = sand.u32 %s138, 1
          %s1135 = smul.addr %s1134, 120
          %s1136 = scalar_lea.vmem [#allocation2], %s1135
          %1137 = dma.done %s1133, 1920
        $region52: #{point_pipeline.1} parent=47 // pred_fallthru
          _
      $region48: #{point_pipeline.1} parent=5 // pred_fallthru
        _
    $region6: #{point_pipeline.1} parent=1 // loop_footer
      %s18 = sadd.s32 1, %s14
    $region7: #{point_pipeline.1} parent=1 // loop_footer_branch
      %13 = sbr.rel target = $region3
    $region8: #{point_pipeline.1} parent=1 // loop_exit
      _
    %1138 = vsyncpa [#allocation3], 1
    %s1139 = scalar_lea.sflag [#allocation3], 1
    %1140 = vsyncpa %s1139, 1

</llo_original>
